<compile_context>
chip_gen: v7x
topology: tpu7x:2x2x1
jax: 0.10.0
libtpu: 0.0.40
codegen_flags: <defaults>
</compile_context>

<pallas_src>
import functools

import jax
import jax.numpy as jnp
import numpy as np
from jax.experimental import pallas as pl
from jax.experimental.pallas import tpu as pltpu


def _round_up(x: int, m: int) -> int:
    return ((x + m - 1) // m) * m


def _pad2d(a, rows: int, cols: int):
    return jnp.pad(a, ((0, rows - a.shape[0]), (0, cols - a.shape[1])))


def _distil_kernel(tw_ref, emb_ref, w1_ref, b1_ref, wh_ref, bh_ref, out_ref,
                   *, task_name: str, n_outs: int):
    # Fused embedding-gather + weighted-mean pooling: (TB, Vp) @ (Vp, Ep) on the MXU.
    pooled = jnp.dot(tw_ref[...], emb_ref[...], preferred_element_type=jnp.float32)

    # fc1 + ReLU
    h = jnp.dot(pooled, w1_ref[...], preferred_element_type=jnp.float32) + b1_ref[...]
    h = jnp.maximum(h, 0.0)

    # head
    logits = jnp.dot(h, wh_ref[...], preferred_element_type=jnp.float32) + bh_ref[...]

    if task_name == "reg":
        out = logits
    elif task_name == "binary":
        out = 1.0 / (1.0 + jnp.exp(-logits))
    elif task_name == "multiclass":
        # Padded lanes (>= n_outs) carry zero logits; mask them so the softmax
        # normalizes only over the real classes.
        lane = jax.lax.broadcasted_iota(jnp.int32, logits.shape, 1)
        logits = jnp.where(lane < n_outs, logits, -jnp.inf)
        m = jnp.max(logits, axis=-1, keepdims=True)
        e = jnp.exp(logits - m)
        out = e * pl.reciprocal(jnp.sum(e, axis=-1, keepdims=True), approx=False)
    else:
        raise ValueError(f"unknown task_name: {task_name}")

    out_ref[...] = out.astype(out_ref.dtype)


def distil_predictor_forward(x_ids, T, params, task_name: str, batch_tile=None):
    """x_ids: (B, S) int32 token ids; T: (B, S) f32 gates."""
    emb = params["emb"].astype(jnp.float32)   # (V, E)
    w1 = params["w1"].astype(jnp.float32)     # (E, H)
    b1 = params["b1"].astype(jnp.float32)     # (1, H)
    wh = params["wh"].astype(jnp.float32)     # (H, O)
    bh = params["bh"].astype(jnp.float32)     # (1, O)

    B, S = x_ids.shape
    V, E = emb.shape
    H = w1.shape[1]
    O = wh.shape[1]

    # Lane-dense / full-MXU-tile padding (zeros are exact; softmax masks padded lanes).
    V_pad = _round_up(V, 128)
    E_pad = _round_up(E, 128)
    H_pad = _round_up(H, 128)
    O_pad = _round_up(O, 128)

    emb_p = _pad2d(emb, V_pad, E_pad)
    w1_p = _pad2d(w1, E_pad, H_pad)
    b1_p = _pad2d(b1, 1, H_pad)
    wh_p = _pad2d(wh, H_pad, O_pad)
    bh_p = _pad2d(bh, 1, O_pad)

    # Fuse "embedding gather + weighted mean" into a single matmul:
    #   pooled = TW @ EMB,  TW[b, v] = sum_{s : x_ids[b,s]==v} T[b,s] / S
    # (scatter-add handles repeated token ids exactly; padded vocab columns stay zero).
    rows = jnp.arange(B, dtype=jnp.int32)[:, None]
    tw = jnp.zeros((B, V_pad), jnp.float32).at[rows, x_ids].add(
        T.astype(jnp.float32) / float(S))

    # Batch tiling.  Blocks are (TB, V_pad) + (TB, O_pad) f32, so even TB=512 is well under
    # 1 MiB per buffer -- fits comfortably on v7x (64 MiB VMEM) as well as v5e/v6e (128 MiB).
    if batch_tile is None:
        batch_tile = min(512, _round_up(B, 8))
    TB = _round_up(min(batch_tile, _round_up(B, 8)), 8)
    B_pad = _round_up(B, TB)
    if B_pad != B:
        tw = jnp.pad(tw, ((0, B_pad - B), (0, 0)))
    grid = (B_pad // TB,)

    kernel = functools.partial(_distil_kernel, task_name=task_name, n_outs=O)

    flops = 2 * B_pad * (V_pad * E_pad + E_pad * H_pad + H_pad * O_pad)
    transcendentals = B_pad * O_pad if task_name in ("binary", "multiclass") else 0
    bytes_accessed = 4 * (B_pad * V_pad + V_pad * E_pad + E_pad * H_pad + H_pad
                          + H_pad * O_pad + O_pad + B_pad * O_pad)

    out = pl.pallas_call(
        kernel,
        out_shape=jax.ShapeDtypeStruct((B_pad, O_pad), jnp.float32),
        grid=grid,
        in_specs=[
            pl.BlockSpec((TB, V_pad), lambda i: (i, 0)),      # TW: streamed per batch tile
            pl.BlockSpec((V_pad, E_pad), lambda i: (0, 0)),   # embedding table: resident
            pl.BlockSpec((E_pad, H_pad), lambda i: (0, 0)),   # w1: resident
            pl.BlockSpec((1, H_pad), lambda i: (0, 0)),       # b1
            pl.BlockSpec((H_pad, O_pad), lambda i: (0, 0)),   # wh
            pl.BlockSpec((1, O_pad), lambda i: (0, 0)),       # bh
        ],
        out_specs=pl.BlockSpec((TB, O_pad), lambda i: (i, 0)),
        compiler_params=pltpu.CompilerParams(
            dimension_semantics=("parallel",)),
        cost_estimate=pl.CostEstimate(flops=flops,
                                      transcendentals=transcendentals,
                                      bytes_accessed=bytes_accessed),
    )(tw, emb_p, w1_p, b1_p, wh_p, bh_p)

    # Strip batch / lane padding.
    return out[:B, :O]


def init_params(key, voc_size, embed_dim, hidden_dim, n_outs):
    """Deterministic synthetic init (mirrors nn.Embedding / nn.Linear shapes)."""
    k_emb, k_w1, k_b1, k_wh, k_bh = jax.random.split(key, 5)
    emb = jax.random.normal(k_emb, (voc_size, embed_dim), jnp.float32)
    lim1 = 1.0 / np.sqrt(embed_dim)
    w1 = jax.random.uniform(k_w1, (embed_dim, hidden_dim), jnp.float32, -lim1, lim1)
    b1 = jax.random.uniform(k_b1, (1, hidden_dim), jnp.float32, -lim1, lim1)
    limh = 1.0 / np.sqrt(hidden_dim)
    wh = jax.random.uniform(k_wh, (hidden_dim, n_outs), jnp.float32, -limh, limh)
    bh = jax.random.uniform(k_bh, (1, n_outs), jnp.float32, -limh, limh)
    return {"emb": emb, "w1": w1, "b1": b1, "wh": wh, "bh": bh}


def reference_forward(x_ids, T, params, task_name):
    embed = jnp.take(params["emb"], x_ids, axis=0)
    pooled = jnp.mean(embed * T[:, :, None], axis=1)
    h = jnp.maximum(pooled @ params["w1"] + params["b1"], 0.0)
    logits = h @ params["wh"] + params["bh"]
    if task_name == "reg":
        return logits
    if task_name == "binary":
        return jax.nn.sigmoid(logits)
    return jax.nn.softmax(logits, axis=-1)


if __name__ == "__main__":
    B, S = 16, 8
    VOC, E, H, O = 64, 32, 32, 4

    key = jax.random.PRNGKey(0)
    k_x, k_t, k_p = jax.random.split(key, 3)

    x_ids = jax.random.randint(k_x, (B, S), 0, VOC, dtype=jnp.int32)
    T = jax.random.uniform(k_t, (B, S), jnp.float32)
    params = init_params(k_p, VOC, E, H, O)

    for task in ("reg", "binary", "multiclass"):
        out = distil_predictor_forward(x_ids, T, params, task, batch_tile=8)
        out = jax.block_until_ready(out)
        ref = reference_forward(x_ids, T, params, task)
        np.testing.assert_allclose(np.asarray(out), np.asarray(ref), rtol=1e-5, atol=1e-5)

    print("KERNEL_OK")
</pallas_src>

<mosaic_0001>
module attributes {stable_mosaic.version = 11 : i64} {
  func.func @_distil_kernel(%arg0: i32, %arg1: memref<8x128xf32, #tpu.memory_space<vmem>>, %arg2: memref<128x128xf32, #tpu.memory_space<vmem>>, %arg3: memref<128x128xf32, #tpu.memory_space<vmem>>, %arg4: memref<1x128xf32, #tpu.memory_space<vmem>>, %arg5: memref<128x128xf32, #tpu.memory_space<vmem>>, %arg6: memref<1x128xf32, #tpu.memory_space<vmem>>, %arg7: memref<8x128xf32, #tpu.memory_space<vmem>>) attributes {dimension_semantics = [#tpu.dimension_semantics<parallel>], iteration_bounds = array<i64: 2>, scalar_prefetch = 0 : i64, scratch_operands = 0 : i64, tpu.core_type = #tpu.core_type<tc>, window_params = [{transform_indices = @transform_0, window_bounds = array<i64: 8, 128>}, {pipeline_mode = #tpu.pipeline_mode<synchronous>, transform_indices = @transform_1, window_bounds = array<i64: 128, 128>}, {pipeline_mode = #tpu.pipeline_mode<synchronous>, transform_indices = @transform_2, window_bounds = array<i64: 128, 128>}, {pipeline_mode = #tpu.pipeline_mode<synchronous>, transform_indices = @transform_3, window_bounds = array<i64: 1, 128>}, {pipeline_mode = #tpu.pipeline_mode<synchronous>, transform_indices = @transform_4, window_bounds = array<i64: 128, 128>}, {pipeline_mode = #tpu.pipeline_mode<synchronous>, transform_indices = @transform_5, window_bounds = array<i64: 1, 128>}, {transform_indices = @transform_6, window_bounds = array<i64: 8, 128>}]} {
    %c0 = arith.constant 0 : index
    %c0_0 = arith.constant 0 : index
    %0 = vector.load %arg1[%c0, %c0_0] : memref<8x128xf32, #tpu.memory_space<vmem>>, vector<8x128xf32>
    %c0_1 = arith.constant 0 : index
    %c0_2 = arith.constant 0 : index
    %1 = vector.load %arg2[%c0_1, %c0_2] : memref<128x128xf32, #tpu.memory_space<vmem>>, vector<128x128xf32>
    %cst = arith.constant dense<0.000000e+00> : vector<8x128xf32>
    %2 = tpu.matmul %0, %1, %cst {dimension_numbers = #tpu.dot_dimension_numbers<[1], [0], [0], [1], [0, 0, 1, 1], [], []>} : vector<8x128xf32>, vector<128x128xf32>, vector<8x128xf32> -> vector<8x128xf32>
    %c0_3 = arith.constant 0 : index
    %c0_4 = arith.constant 0 : index
    %3 = vector.load %arg3[%c0_3, %c0_4] : memref<128x128xf32, #tpu.memory_space<vmem>>, vector<128x128xf32>
    %cst_5 = arith.constant dense<0.000000e+00> : vector<8x128xf32>
    %4 = tpu.matmul %2, %3, %cst_5 {dimension_numbers = #tpu.dot_dimension_numbers<[1], [0], [0], [1], [0, 0, 1, 1], [], []>} : vector<8x128xf32>, vector<128x128xf32>, vector<8x128xf32> -> vector<8x128xf32>
    %c0_6 = arith.constant 0 : index
    %c0_7 = arith.constant 0 : index
    %5 = vector.load %arg4[%c0_6, %c0_7] : memref<1x128xf32, #tpu.memory_space<vmem>>, vector<1x128xf32>
    %6 = vector.broadcast %5 : vector<1x128xf32> to vector<8x128xf32>
    %7 = arith.addf %4, %6 : vector<8x128xf32>
    %cst_8 = arith.constant 0.000000e+00 : f32
    %8 = vector.broadcast %cst_8 : f32 to vector<8x128xf32>
    %9 = arith.maximumf %7, %8 : vector<8x128xf32>
    %c0_9 = arith.constant 0 : index
    %c0_10 = arith.constant 0 : index
    %10 = vector.load %arg5[%c0_9, %c0_10] : memref<128x128xf32, #tpu.memory_space<vmem>>, vector<128x128xf32>
    %cst_11 = arith.constant dense<0.000000e+00> : vector<8x128xf32>
    %11 = tpu.matmul %9, %10, %cst_11 {dimension_numbers = #tpu.dot_dimension_numbers<[1], [0], [0], [1], [0, 0, 1, 1], [], []>} : vector<8x128xf32>, vector<128x128xf32>, vector<8x128xf32> -> vector<8x128xf32>
    %c0_12 = arith.constant 0 : index
    %c0_13 = arith.constant 0 : index
    %12 = vector.load %arg6[%c0_12, %c0_13] : memref<1x128xf32, #tpu.memory_space<vmem>>, vector<1x128xf32>
    %13 = vector.broadcast %12 : vector<1x128xf32> to vector<8x128xf32>
    %14 = arith.addf %11, %13 : vector<8x128xf32>
    %c0_14 = arith.constant 0 : index
    %c0_15 = arith.constant 0 : index
    %15 = vector.load %arg7[%c0_14, %c0_15] : memref<8x128xf32, #tpu.memory_space<vmem>>, vector<8x128xf32>
    tpu.vector_store %arg7[%c0_14, %c0_15], %14 {strides = array<i32>} : memref<8x128xf32, #tpu.memory_space<vmem>>, vector<8x128xf32>,
    return
  }
  func.func @transform_0(%arg0: i32) -> (i32, i32) {
    %c0_i32 = arith.constant 0 : i32
    %c0_i32_0 = arith.constant 0 : i32
    return %arg0, %c0_i32 : i32, i32
  }
  func.func @transform_1(%arg0: i32) -> (i32, i32) {
    %c0_i32 = arith.constant 0 : i32
    %c0_i32_0 = arith.constant 0 : i32
    %c0_i32_1 = arith.constant 0 : i32
    return %c0_i32, %c0_i32_0 : i32, i32
  }
  func.func @transform_2(%arg0: i32) -> (i32, i32) {
    %c0_i32 = arith.constant 0 : i32
    %c0_i32_0 = arith.constant 0 : i32
    %c0_i32_1 = arith.constant 0 : i32
    return %c0_i32, %c0_i32_0 : i32, i32
  }
  func.func @transform_3(%arg0: i32) -> (i32, i32) {
    %c0_i32 = arith.constant 0 : i32
    %c0_i32_0 = arith.constant 0 : i32
    %c0_i32_1 = arith.constant 0 : i32
    return %c0_i32, %c0_i32_0 : i32, i32
  }
  func.func @transform_4(%arg0: i32) -> (i32, i32) {
    %c0_i32 = arith.constant 0 : i32
    %c0_i32_0 = arith.constant 0 : i32
    %c0_i32_1 = arith.constant 0 : i32
    return %c0_i32, %c0_i32_0 : i32, i32
  }
  func.func @transform_5(%arg0: i32) -> (i32, i32) {
    %c0_i32 = arith.constant 0 : i32
    %c0_i32_0 = arith.constant 0 : i32
    %c0_i32_1 = arith.constant 0 : i32
    return %c0_i32, %c0_i32_0 : i32, i32
  }
  func.func @transform_6(%arg0: i32) -> (i32, i32) {
    %c0_i32 = arith.constant 0 : i32
    %c0_i32_0 = arith.constant 0 : i32
    return %arg0, %c0_i32 : i32, i32
  }
}

</mosaic_0001>

<llo_original>
// kernel: tpu_custom_call.1
$region0: #{tpu_custom_call.1}
  #allocation0 [shape = 'u32[]', space=smem, size = 0x4, offset = 0x4, fixed_abs, tag = 'smem constant byte address 0x4 - core index']
  #allocation1 [shape = 'u32[144,128]{1,0:T(1,128)}', space=vmem, size = 0x12000, scoped, tag = 'internal scratch']
  %s0 = inlined_call_operand.hbm [shape: f32[16,128], index: 0, kind: input, shape index: {}]
  %s1 = inlined_call_operand.hbm [shape: f32[128,128], index: 1, kind: input, shape index: {}]
  %s2 = inlined_call_operand.hbm [shape: f32[128,128], index: 2, kind: input, shape index: {}]
  %s3 = inlined_call_operand.vmem [shape: f32[1,128], index: 3, kind: input, shape index: {}]
  %s4 = inlined_call_operand.hbm [shape: f32[128,128], index: 4, kind: input, shape index: {}]
  %s5 = inlined_call_operand.vmem [shape: f32[1,128], index: 5, kind: input, shape index: {}]
  %s6 = inlined_call_operand.hbm [shape: f32[16,128], index: 6, kind: output, shape index: {}]
  %s7 = sld [smem:[#allocation0]]
  $region73: #{tpu_custom_call.1} parent=0
    _
  %s9 = ssub.s32 1, %s7
  %s10 = scalar_select 0, %s9, %s7
  $region1: #{tpu_custom_call.1} parent=0
    #allocation2 [shape = 'u8[8192]{0}', space=vmem, size = 0x2000, scoped, tag = 'input window, operand 0']
    #allocation3 [shape = 's32[2]{0}', space=sflag, size = 0x8, scoped, tag = 'scoped memory for tpu_custom_call.1']
    #allocation4 [shape = 's32[2]{0}', space=sflag, size = 0x8, scoped, tag = 'scoped memory for tpu_custom_call.1']
    #allocation5 [shape = 'u8[65536]{0}', space=vmem, size = 0x10000, scoped, tag = 'input window, operand 1, single buffered']
    #allocation6 [shape = 's32[1]{0}', space=sflag, size = 0x4, scoped, tag = 'scoped memory for tpu_custom_call.1']
    #allocation7 [shape = 'u8[65536]{0}', space=vmem, size = 0x10000, scoped, tag = 'input window, operand 2, single buffered']
    #allocation8 [shape = 'u8[65536]{0}', space=vmem, size = 0x10000, scoped, tag = 'input window, operand 4, single buffered']
    #allocation9 [shape = 's32[1]{0}', space=sflag, size = 0x4, scoped, tag = 'scoped memory for tpu_custom_call.1']
    #allocation10 [shape = 'u8[8192]{0}', space=vmem, size = 0x2000, scoped, tag = 'output window, operand 0']
    %11 = vsyncpa [#allocation3], 0
    %s12 = scalar_lea.sflag [#allocation3], 1
    %13 = vsyncpa %s12, 0
    %14 = vsyncpa [#allocation6], 0
    %15 = vsyncpa [#allocation9], 0
    %16 = vsyncpa [#allocation4], 0
    %s17 = scalar_lea.sflag [#allocation4], 1
    %18 = vsyncpa %s17, 0
    loop: start=0, step=1, limit=4
    $region2: #{tpu_custom_call.1} parent=1 // loop_pre_header
      _
    $region3: #{tpu_custom_call.1} parent=1 // loop_header
      %s20 = sphi 0, %s24
      %p21 = scmp.ge.s32.totalorder %s20, 4
      %s30 = sphi 0, %s32
      %s33 = sphi 0, %s30
      %s34 = sphi 0, %s33
      %s50 = sphi 0, %s34
      %s54 = sphi 0, %s54
      %s56 = sphi 0, %s54
      %s57 = sphi 0, %s56
      %s71 = sphi 0, %s57
      %s75 = sphi 0, %s75
      %s77 = sphi 0, %s75
      %s78 = sphi 0, %s77
      %s92 = sphi 0, %s78
      %s96 = sphi 0, %s96
      %s98 = sphi 0, %s96
      %s99 = sphi 0, %s98
      %s113 = sphi 0, %s99
      %s117 = sphi 0, %s117
      %s119 = sphi 0, %s117
      %s120 = sphi 0, %s119
      %s134 = sphi 0, %s120
      %s138 = sphi 0, %s138
      %s140 = sphi 0, %s138
      %s141 = sphi 0, %s140
      %s155 = sphi 0, %s141
      %s161 = sphi 0, %s163
      %s164 = sphi 0, %s161
      %s165 = sphi 0, %s164
      %s181 = sphi 0, %s165
    $region4: #{tpu_custom_call.1} parent=1 // loop_header_branch
      %23 = sbr.rel (%p21) target = $region8
    $region5: #{tpu_custom_call.1} parent=1 // loop_body
      %s25 = ssub.s32 %s20, 1
      %s26 = ssub.s32 %s20, 2
      %s27 = sadd.s32 %s20, 1
      %s28 = ssub.s32 %s20, %s27
      %p29 = scmp.eq.s32.totalorder %s28, 0
      %s31 = sadd.s32 %s30, 1
      %s32 = scalar_select %p29, %s30, %s31
      %p35 = pneg %p29
      %p36 = scmp.eq.s32.totalorder %s20, 1
      %p37 = por %p35, %p36
      %p38 = scmp.ne.s32.totalorder %s30, %s33
      %p39 = scmp.eq.s32.totalorder %s20, 0
      %p40 = por %p38, %p39
      %p41 = scmp.ne.s32.totalorder %s30, %s33
      %p42 = scmp.eq.s32.totalorder %s25, 1
      %p43 = por %p41, %p42
      %p44 = scmp.ne.s32.totalorder %s33, %s34
      %p45 = scmp.eq.s32.totalorder %s25, 0
      %p46 = por %p44, %p45
      %p47 = scmp.ne.s32.totalorder %s33, %s34
      %p48 = scmp.eq.s32.totalorder %s26, 1
      %p49 = por %p47, %p48
      %p51 = scmp.ne.s32.totalorder %s34, %s50
      %p52 = scmp.eq.s32.totalorder %s26, 0
      %p53 = por %p51, %p52
      %s55 = sadd.s32 %s54, 1
      %p58 = scmp.eq.s32.totalorder %s20, 1
      %p59 = scmp.ne.s32.totalorder %s54, %s56
      %p60 = scmp.eq.s32.totalorder %s20, 0
      %p61 = por %p59, %p60
      %p62 = scmp.ne.s32.totalorder %s54, %s56
      %p63 = scmp.eq.s32.totalorder %s25, 1
      %p64 = por %p62, %p63
      %p65 = scmp.ne.s32.totalorder %s56, %s57
      %p66 = scmp.eq.s32.totalorder %s25, 0
      %p67 = por %p65, %p66
      %p68 = scmp.ne.s32.totalorder %s56, %s57
      %p69 = scmp.eq.s32.totalorder %s26, 1
      %p70 = por %p68, %p69
      %p72 = scmp.ne.s32.totalorder %s57, %s71
      %p73 = scmp.eq.s32.totalorder %s26, 0
      %p74 = por %p72, %p73
      %s76 = sadd.s32 %s75, 1
      %p79 = scmp.eq.s32.totalorder %s20, 1
      %p80 = scmp.ne.s32.totalorder %s75, %s77
      %p81 = scmp.eq.s32.totalorder %s20, 0
      %p82 = por %p80, %p81
      %p83 = scmp.ne.s32.totalorder %s75, %s77
      %p84 = scmp.eq.s32.totalorder %s25, 1
      %p85 = por %p83, %p84
      %p86 = scmp.ne.s32.totalorder %s77, %s78
      %p87 = scmp.eq.s32.totalorder %s25, 0
      %p88 = por %p86, %p87
      %p89 = scmp.ne.s32.totalorder %s77, %s78
      %p90 = scmp.eq.s32.totalorder %s26, 1
      %p91 = por %p89, %p90
      %p93 = scmp.ne.s32.totalorder %s78, %s92
      %p94 = scmp.eq.s32.totalorder %s26, 0
      %p95 = por %p93, %p94
      %s97 = sadd.s32 %s96, 1
      %p100 = scmp.eq.s32.totalorder %s20, 1
      %p101 = scmp.ne.s32.totalorder %s96, %s98
      %p102 = scmp.eq.s32.totalorder %s20, 0
      %p103 = por %p101, %p102
      %p104 = scmp.ne.s32.totalorder %s96, %s98
      %p105 = scmp.eq.s32.totalorder %s25, 1
      %p106 = por %p104, %p105
      %p107 = scmp.ne.s32.totalorder %s98, %s99
      %p108 = scmp.eq.s32.totalorder %s25, 0
      %p109 = por %p107, %p108
      %p110 = scmp.ne.s32.totalorder %s98, %s99
      %p111 = scmp.eq.s32.totalorder %s26, 1
      %p112 = por %p110, %p111
      %p114 = scmp.ne.s32.totalorder %s99, %s113
      %p115 = scmp.eq.s32.totalorder %s26, 0
      %p116 = por %p114, %p115
      %s118 = sadd.s32 %s117, 1
      %p121 = scmp.eq.s32.totalorder %s20, 1
      %p122 = scmp.ne.s32.totalorder %s117, %s119
      %p123 = scmp.eq.s32.totalorder %s20, 0
      %p124 = por %p122, %p123
      %p125 = scmp.ne.s32.totalorder %s117, %s119
      %p126 = scmp.eq.s32.totalorder %s25, 1
      %p127 = por %p125, %p126
      %p128 = scmp.ne.s32.totalorder %s119, %s120
      %p129 = scmp.eq.s32.totalorder %s25, 0
      %p130 = por %p128, %p129
      %p131 = scmp.ne.s32.totalorder %s119, %s120
      %p132 = scmp.eq.s32.totalorder %s26, 1
      %p133 = por %p131, %p132
      %p135 = scmp.ne.s32.totalorder %s120, %s134
      %p136 = scmp.eq.s32.totalorder %s26, 0
      %p137 = por %p135, %p136
      %s139 = sadd.s32 %s138, 1
      %p142 = scmp.eq.s32.totalorder %s20, 1
      %p143 = scmp.ne.s32.totalorder %s138, %s140
      %p144 = scmp.eq.s32.totalorder %s20, 0
      %p145 = por %p143, %p144
      %p146 = scmp.ne.s32.totalorder %s138, %s140
      %p147 = scmp.eq.s32.totalorder %s25, 1
      %p148 = por %p146, %p147
      %p149 = scmp.ne.s32.totalorder %s140, %s141
      %p150 = scmp.eq.s32.totalorder %s25, 0
      %p151 = por %p149, %p150
      %p152 = scmp.ne.s32.totalorder %s140, %s141
      %p153 = scmp.eq.s32.totalorder %s26, 1
      %p154 = por %p152, %p153
      %p156 = scmp.ne.s32.totalorder %s141, %s155
      %p157 = scmp.eq.s32.totalorder %s26, 0
      %p158 = por %p156, %p157
      %s159 = ssub.s32 %s20, %s27
      %p160 = scmp.eq.s32.totalorder %s159, 0
      %s162 = sadd.s32 %s161, 1
      %s163 = scalar_select %p160, %s161, %s162
      %p166 = pneg %p160
      %p167 = scmp.eq.s32.totalorder %s20, 1
      %p168 = por %p166, %p167
      %p169 = scmp.ne.s32.totalorder %s161, %s164
      %p170 = scmp.eq.s32.totalorder %s20, 0
      %p171 = por %p169, %p170
      %p172 = scmp.ne.s32.totalorder %s161, %s164
      %p173 = scmp.eq.s32.totalorder %s25, 1
      %p174 = por %p172, %p173
      %p175 = scmp.ne.s32.totalorder %s164, %s165
      %p176 = scmp.eq.s32.totalorder %s25, 0
      %p177 = por %p175, %p176
      %p178 = scmp.ne.s32.totalorder %s164, %s165
      %p179 = scmp.eq.s32.totalorder %s26, 1
      %p180 = por %p178, %p179
      %p182 = scmp.ne.s32.totalorder %s165, %s181
      %p183 = scmp.eq.s32.totalorder %s26, 0
      %p184 = por %p182, %p183
      %p185 = scmp.le.s32.totalorder 1, %s20
      %p186 = scmp.lt.s32.totalorder %s20, 3
      %p187 = pnand %p185, %p186
      %p188 = pneg %p187
      // Predicated region
      $region9: #{tpu_custom_call.1} parent=5 // pred_check
        _
      $region10: #{tpu_custom_call.1} parent=5 // pred_check_branch
        %190 = sbr.rel (%p187) target = $region12
      $region11: #{tpu_custom_call.1} parent=5 // pred_region
        %s191 = ssub.s32 %s20, 1
        // Predicated region
        $region13: #{tpu_custom_call.1} parent=11 // pred_check
          %p192 = pneg %p67
        $region14: #{tpu_custom_call.1} parent=11 // pred_check_branch
          %194 = sbr.rel (%p192) target = $region16
        $region15: #{tpu_custom_call.1} parent=11 // pred_region
          %s196 = ssub.s32 2048, 2048
          %197 = vsyncadd [#allocation6], %s196
          %s198 = sshll.u32 [#allocation5], 4
          %s199 = int_to_ptr.vmem [resolvable:$true] %s198
          %204 = dma.hbm_to_vmem [thread:$0]  %s1, 2048, %s199, [#allocation6], 128, 128, 8
        $region16: #{tpu_custom_call.1} parent=11 // pred_fallthru
          _
        // Predicated region
        $region17: #{tpu_custom_call.1} parent=11 // pred_check
          %p205 = pneg %p88
        $region18: #{tpu_custom_call.1} parent=11 // pred_check_branch
          %207 = sbr.rel (%p205) target = $region20
        $region19: #{tpu_custom_call.1} parent=11 // pred_region
          %s209 = ssub.s32 2048, 2048
          %210 = vsyncadd [#allocation6], %s209
          %s211 = sshll.u32 [#allocation7], 4
          %s212 = int_to_ptr.vmem [resolvable:$true] %s211
          %217 = dma.hbm_to_vmem [thread:$0]  %s2, 2048, %s212, [#allocation6], 128, 128, 8
        $region20: #{tpu_custom_call.1} parent=11 // pred_fallthru
          _
        // Predicated region
        $region21: #{tpu_custom_call.1} parent=11 // pred_check
          %p218 = pneg %p109
        $region22: #{tpu_custom_call.1} parent=11 // pred_check_branch
          %220 = sbr.rel (%p218) target = $region24
        $region23: #{tpu_custom_call.1} parent=11 // pred_region
          _
        $region24: #{tpu_custom_call.1} parent=11 // pred_fallthru
          _
        // Predicated region
        $region25: #{tpu_custom_call.1} parent=11 // pred_check
          %p221 = pneg %p130
        $region26: #{tpu_custom_call.1} parent=11 // pred_check_branch
          %223 = sbr.rel (%p221) target = $region28
        $region27: #{tpu_custom_call.1} parent=11 // pred_region
          %s225 = ssub.s32 2048, 2048
          %226 = vsyncadd [#allocation9], %s225
          %s227 = sshll.u32 [#allocation8], 4
          %s228 = int_to_ptr.vmem [resolvable:$true] %s227
          %233 = dma.hbm_to_vmem [thread:$0]  %s4, 2048, %s228, [#allocation9], 128, 128, 8
        $region28: #{tpu_custom_call.1} parent=11 // pred_fallthru
          _
        // Predicated region
        $region29: #{tpu_custom_call.1} parent=11 // pred_check
          %p234 = pneg %p151
        $region30: #{tpu_custom_call.1} parent=11 // pred_check_branch
          %236 = sbr.rel (%p234) target = $region32
        $region31: #{tpu_custom_call.1} parent=11 // pred_region
          _
        $region32: #{tpu_custom_call.1} parent=11 // pred_fallthru
          _
      $region12: #{tpu_custom_call.1} parent=5 // pred_fallthru
        _
      %p237 = scmp.lt.s32.totalorder %s20, 2
      // Predicated region
      $region33: #{tpu_custom_call.1} parent=5 // pred_check
        %p238 = pneg %p237
      $region34: #{tpu_custom_call.1} parent=5 // pred_check_branch
        %240 = sbr.rel (%p238) target = $region36
      $region35: #{tpu_custom_call.1} parent=5 // pred_region
        // Predicated region
        $region37: #{tpu_custom_call.1} parent=35 // pred_check
          %p241 = pneg %p40
        $region38: #{tpu_custom_call.1} parent=35 // pred_check_branch
          %243 = sbr.rel (%p241) target = $region40
        $region39: #{tpu_custom_call.1} parent=35 // pred_region
          %s244 = sand.u32 %s30, 1
          %s245 = scalar_lea.sflag [#allocation3], %s244
          %s246 = sand.u32 %s30, 1
          %s247 = smul.addr %s246, 8
          %s248 = scalar_lea.vmem [#allocation2], %s247
          %s250 = ssub.s32 128, 128
          %251 = vsyncadd %s245, %s250
          %s252 = smul.addr %s20, 128
          %s253 = scalar_lea.hbm %s0, %s252
          %s255 = sshll.u32 %s248, 4
          %s256 = int_to_ptr.vmem [resolvable:$true] %s255
          %258 = dma.hbm_to_vmem [thread:$0]  %s253, 128, %s256, %s245
        $region40: #{tpu_custom_call.1} parent=35 // pred_fallthru
          _
      $region36: #{tpu_custom_call.1} parent=5 // pred_fallthru
        _
      %p259 = scmp.le.s32.totalorder 1, %s20
      %p260 = scmp.lt.s32.totalorder %s20, 3
      %p261 = pnand %p259, %p260
      %p262 = pneg %p261
      // Predicated region
      $region41: #{tpu_custom_call.1} parent=5 // pred_check
        _
      $region42: #{tpu_custom_call.1} parent=5 // pred_check_branch
        %264 = sbr.rel (%p261) target = $region44
      $region43: #{tpu_custom_call.1} parent=5 // pred_region
        %s265 = ssub.s32 %s20, 1
        %s266 = sand.u32 %s33, 1
        %s267 = scalar_lea.sflag [#allocation3], %s266
        %s268 = sand.u32 %s33, 1
        %s269 = smul.addr %s268, 8
        %s270 = scalar_lea.vmem [#allocation2], %s269
        // Predicated region
        $region45: #{tpu_custom_call.1} parent=43 // pred_check
          %p271 = pneg %p46
        $region46: #{tpu_custom_call.1} parent=43 // pred_check_branch
          %273 = sbr.rel (%p271) target = $region48
        $region47: #{tpu_custom_call.1} parent=43 // pred_region
          %274 = dma.done %s267, 128
        $region48: #{tpu_custom_call.1} parent=43 // pred_fallthru
          _
        // Predicated region
        $region49: #{tpu_custom_call.1} parent=43 // pred_check
          %p275 = pneg %p67
        $region50: #{tpu_custom_call.1} parent=43 // pred_check_branch
          %277 = sbr.rel (%p275) target = $region52
        $region51: #{tpu_custom_call.1} parent=43 // pred_region
          %278 = dma.done [#allocation6], 2048
        $region52: #{tpu_custom_call.1} parent=43 // pred_fallthru
          _
        // Predicated region
        $region53: #{tpu_custom_call.1} parent=43 // pred_check
          %p279 = pneg %p88
        $region54: #{tpu_custom_call.1} parent=43 // pred_check_branch
          %281 = sbr.rel (%p279) target = $region56
        $region55: #{tpu_custom_call.1} parent=43 // pred_region
          %282 = dma.done [#allocation6], 2048
        $region56: #{tpu_custom_call.1} parent=43 // pred_fallthru
          _
        // Predicated region
        $region57: #{tpu_custom_call.1} parent=43 // pred_check
          %p283 = pneg %p130
        $region58: #{tpu_custom_call.1} parent=43 // pred_check_branch
          %285 = sbr.rel (%p283) target = $region60
        $region59: #{tpu_custom_call.1} parent=43 // pred_region
          %286 = dma.done [#allocation9], 2048
        $region60: #{tpu_custom_call.1} parent=43 // pred_fallthru
          _
        %s287 = sand.u32 %s33, 1
        %s288 = scalar_lea.sflag [#allocation3], %s287
        %s289 = sand.u32 %s33, 1
        %s290 = smul.addr %s289, 8
        %s291 = scalar_lea.vmem [#allocation2], %s290
        %p292 = pneg %p46
        %p293 = pneg %p43
        %p294 = pneg %p67
        %p295 = pneg %p64
        %p296 = pneg %p88
        %p297 = pneg %p85
        %p298 = pneg %p109
        %p299 = pneg %p106
        %p300 = pneg %p130
        %p301 = pneg %p127
        %p302 = pneg %p151
        %p303 = pneg %p148
        %p304 = pneg %p177
        %p305 = pneg %p174
        %s306 = sand.u32 %s164, 1
        %s307 = scalar_lea.sflag [#allocation4], %s306
        %s308 = sand.u32 %s164, 1
        %s309 = smul.addr %s308, 8
        %s310 = scalar_lea.vmem [#allocation10], %s309
        %v311 = vld [vmem:[%s270] sm:$0xff]
        %v312 = vld [vmem:[#allocation5] sm:$0xff]
        %v313 = vld [vmem:[#allocation5 + $0x8] sm:$0xff]
        %v314 = vld [vmem:[#allocation5 + $0x10] sm:$0xff]
        %v315 = vld [vmem:[#allocation5 + $0x18] sm:$0xff]
        %v316 = vld [vmem:[#allocation5 + $0x20] sm:$0xff]
        %v317 = vld [vmem:[#allocation5 + $0x28] sm:$0xff]
        %v318 = vld [vmem:[#allocation5 + $0x30] sm:$0xff]
        %v319 = vld [vmem:[#allocation5 + $0x38] sm:$0xff]
        %v320 = vld [vmem:[#allocation5 + $0x40] sm:$0xff]
        %v321 = vld [vmem:[#allocation5 + $0x48] sm:$0xff]
        %v322 = vld [vmem:[#allocation5 + $0x50] sm:$0xff]
        %v323 = vld [vmem:[#allocation5 + $0x58] sm:$0xff]
        %v324 = vld [vmem:[#allocation5 + $0x60] sm:$0xff]
        %v325 = vld [vmem:[#allocation5 + $0x68] sm:$0xff]
        %v326 = vld [vmem:[#allocation5 + $0x70] sm:$0xff]
        %v327 = vld [vmem:[#allocation5 + $0x78] sm:$0xff]
        %328 = vmatprep.subr.mxu0 0.0
        %329 = vmatpush1.msra.mxu0 %v312
        %330 = vmatprep.subr.mxu0 0.0
        %331 = vmatpush1.msra.mxu0 %v313
        %332 = vmatprep.subr.mxu0 0.0
        %333 = vmatpush1.msra.mxu0 %v314
        %334 = vmatprep.subr.mxu0 0.0
        %335 = vmatpush1.msra.mxu0 %v315
        %336 = vmatprep.subr.mxu0 0.0
        %337 = vmatpush1.msra.mxu0 %v316
        %338 = vmatprep.subr.mxu0 0.0
        %339 = vmatpush1.msra.mxu0 %v317
        %340 = vmatprep.subr.mxu0 0.0
        %341 = vmatpush1.msra.mxu0 %v318
        %342 = vmatprep.subr.mxu0 0.0
        %343 = vmatpush1.msra.mxu0 %v319
        %344 = vmatprep.subr.mxu0 0.0
        %345 = vmatpush1.msra.mxu0 %v320
        %346 = vmatprep.subr.mxu0 0.0
        %347 = vmatpush1.msra.mxu0 %v321
        %348 = vmatprep.subr.mxu0 0.0
        %349 = vmatpush1.msra.mxu0 %v322
        %350 = vmatprep.subr.mxu0 0.0
        %351 = vmatpush1.msra.mxu0 %v323
        %352 = vmatprep.subr.mxu0 0.0
        %353 = vmatpush1.msra.mxu0 %v324
        %354 = vmatprep.subr.mxu0 0.0
        %355 = vmatpush1.msra.mxu0 %v325
        %356 = vmatprep.subr.mxu0 0.0
        %357 = vmatpush1.msra.mxu0 %v326
        %358 = vmatprep.subr.mxu0 0.0
        %359 = vmatpush1.msra.mxu0 %v327
        %360 = vmatprep.subr.mxu0 0.0
        %361 = vmatpush1.msra.mxu0 0.0
        %362 = vmatprep.subr.mxu0 0.0
        %363 = vmatpush1.msra.mxu0 0.0
        %364 = vmatprep.subr.mxu0 0.0
        %365 = vmatpush1.msra.mxu0 0.0
        %366 = vmatprep.subr.mxu0 0.0
        %367 = vmatpush1.msra.mxu0 0.0
        %368 = vmatprep.subr.mxu0 0.0
        %369 = vmatpush1.msra.mxu0 0.0
        %370 = vmatprep.subr.mxu0 0.0
        %371 = vmatpush1.msra.mxu0 0.0
        %372 = vmatprep.subr.mxu0 0.0
        %373 = vmatpush1.msra.mxu0 0.0
        %374 = vmatprep.subr.mxu0 0.0
        %375 = vmatpush1.msra.mxu0 0.0
        %376 = vmatprep.subr.mxu0 0.0
        %377 = vmatpush1.msra.mxu0 0.0
        %378 = vmatprep.subr.mxu0 0.0
        %379 = vmatpush1.msra.mxu0 0.0
        %380 = vmatprep.subr.mxu0 0.0
        %381 = vmatpush1.msra.mxu0 0.0
        %382 = vmatprep.subr.mxu0 0.0
        %383 = vmatpush1.msra.mxu0 0.0
        %384 = vmatprep.subr.mxu0 0.0
        %385 = vmatpush1.msra.mxu0 0.0
        %386 = vmatprep.subr.mxu0 0.0
        %387 = vmatpush1.msra.mxu0 0.0
        %388 = vmatprep.subr.mxu0 0.0
        %389 = vmatpush1.msra.mxu0 0.0
        %390 = vmatprep.subr.mxu0 0.0
        %391 = vmatpush1.msra.mxu0 0.0
        %392 = vmatprep.mubr.f32.mxu0 0.0
        %393 = vmatmul.mubr.f32.gmra.mrb[0].mxu0 %v311
        %v394 = vpop.f32.mrb[0].mxu0
        %v395 = vadd.f32 0.0, %v394
        %v396 = vpop.f32.mrb[0].mxu0
        %397 = vdwg.mxu0
        %v398 = vld [vmem:[#allocation7] sm:$0xff]
        %v399 = vld [vmem:[#allocation7 + $0x8] sm:$0xff]
        %v400 = vld [vmem:[#allocation7 + $0x10] sm:$0xff]
        %v401 = vld [vmem:[#allocation7 + $0x18] sm:$0xff]
        %v402 = vld [vmem:[#allocation7 + $0x20] sm:$0xff]
        %v403 = vld [vmem:[#allocation7 + $0x28] sm:$0xff]
        %v404 = vld [vmem:[#allocation7 + $0x30] sm:$0xff]
        %v405 = vld [vmem:[#allocation7 + $0x38] sm:$0xff]
        %v406 = vld [vmem:[#allocation7 + $0x40] sm:$0xff]
        %v407 = vld [vmem:[#allocation7 + $0x48] sm:$0xff]
        %v408 = vld [vmem:[#allocation7 + $0x50] sm:$0xff]
        %v409 = vld [vmem:[#allocation7 + $0x58] sm:$0xff]
        %v410 = vld [vmem:[#allocation7 + $0x60] sm:$0xff]
        %v411 = vld [vmem:[#allocation7 + $0x68] sm:$0xff]
        %v412 = vld [vmem:[#allocation7 + $0x70] sm:$0xff]
        %v413 = vld [vmem:[#allocation7 + $0x78] sm:$0xff]
        %v414 = vld [vmem:[%s3] sm:$0x1]
        %v416 = vlaneseq
        %v417 = vshrl.u32 %v416, 7
        %v418 = vsub.s32 0, %v417
        %v419 = vrot.slane %v414, %v418
        %421 = vmatprep.subr.mxu0 0.0
        %422 = vmatpush1.msra.mxu0 %v398
        %423 = vmatprep.subr.mxu0 0.0
        %424 = vmatpush1.msra.mxu0 %v399
        %425 = vmatprep.subr.mxu0 0.0
        %426 = vmatpush1.msra.mxu0 %v400
        %427 = vmatprep.subr.mxu0 0.0
        %428 = vmatpush1.msra.mxu0 %v401
        %429 = vmatprep.subr.mxu0 0.0
        %430 = vmatpush1.msra.mxu0 %v402
        %431 = vmatprep.subr.mxu0 0.0
        %432 = vmatpush1.msra.mxu0 %v403
        %433 = vmatprep.subr.mxu0 0.0
        %434 = vmatpush1.msra.mxu0 %v404
        %435 = vmatprep.subr.mxu0 0.0
        %436 = vmatpush1.msra.mxu0 %v405
        %437 = vmatprep.subr.mxu0 0.0
        %438 = vmatpush1.msra.mxu0 %v406
        %439 = vmatprep.subr.mxu0 0.0
        %440 = vmatpush1.msra.mxu0 %v407
        %441 = vmatprep.subr.mxu0 0.0
        %442 = vmatpush1.msra.mxu0 %v408
        %443 = vmatprep.subr.mxu0 0.0
        %444 = vmatpush1.msra.mxu0 %v409
        %445 = vmatprep.subr.mxu0 0.0
        %446 = vmatpush1.msra.mxu0 %v410
        %447 = vmatprep.subr.mxu0 0.0
        %448 = vmatpush1.msra.mxu0 %v411
        %449 = vmatprep.subr.mxu0 0.0
        %450 = vmatpush1.msra.mxu0 %v412
        %451 = vmatprep.subr.mxu0 0.0
        %452 = vmatpush1.msra.mxu0 %v413
        %453 = vmatprep.subr.mxu0 0.0
        %454 = vmatpush1.msra.mxu0 0.0
        %455 = vmatprep.subr.mxu0 0.0
        %456 = vmatpush1.msra.mxu0 0.0
        %457 = vmatprep.subr.mxu0 0.0
        %458 = vmatpush1.msra.mxu0 0.0
        %459 = vmatprep.subr.mxu0 0.0
        %460 = vmatpush1.msra.mxu0 0.0
        %461 = vmatprep.subr.mxu0 0.0
        %462 = vmatpush1.msra.mxu0 0.0
        %463 = vmatprep.subr.mxu0 0.0
        %464 = vmatpush1.msra.mxu0 0.0
        %465 = vmatprep.subr.mxu0 0.0
        %466 = vmatpush1.msra.mxu0 0.0
        %467 = vmatprep.subr.mxu0 0.0
        %468 = vmatpush1.msra.mxu0 0.0
        %469 = vmatprep.subr.mxu0 0.0
        %470 = vmatpush1.msra.mxu0 0.0
        %471 = vmatprep.subr.mxu0 0.0
        %472 = vmatpush1.msra.mxu0 0.0
        %473 = vmatprep.subr.mxu0 0.0
        %474 = vmatpush1.msra.mxu0 0.0
        %475 = vmatprep.subr.mxu0 0.0
        %476 = vmatpush1.msra.mxu0 0.0
        %477 = vmatprep.subr.mxu0 0.0
        %478 = vmatpush1.msra.mxu0 0.0
        %479 = vmatprep.subr.mxu0 0.0
        %480 = vmatpush1.msra.mxu0 0.0
        %481 = vmatprep.subr.mxu0 0.0
        %482 = vmatpush1.msra.mxu0 0.0
        %483 = vmatprep.subr.mxu0 0.0
        %484 = vmatpush1.msra.mxu0 0.0
        %485 = vmatprep.mubr.f32.mxu0 0.0
        %486 = vmatmul.mubr.f32.gmra.mrb[0].mxu0 %v395
        %v487 = vpop.f32.mrb[0].mxu0
        %v488 = vadd.f32 %v419, %v487
        %v489 = vpop.f32.mrb[0].mxu0
        %490 = vdwg.mxu0
        %v491 = vmax.f32 %v488, 0.0
        %v492 = vld [vmem:[#allocation8] sm:$0xff]
        %v493 = vld [vmem:[#allocation8 + $0x8] sm:$0xff]
        %v494 = vld [vmem:[#allocation8 + $0x10] sm:$0xff]
        %v495 = vld [vmem:[#allocation8 + $0x18] sm:$0xff]
        %v496 = vld [vmem:[#allocation8 + $0x20] sm:$0xff]
        %v497 = vld [vmem:[#allocation8 + $0x28] sm:$0xff]
        %v498 = vld [vmem:[#allocation8 + $0x30] sm:$0xff]
        %v499 = vld [vmem:[#allocation8 + $0x38] sm:$0xff]
        %v500 = vld [vmem:[#allocation8 + $0x40] sm:$0xff]
        %v501 = vld [vmem:[#allocation8 + $0x48] sm:$0xff]
        %v502 = vld [vmem:[#allocation8 + $0x50] sm:$0xff]
        %v503 = vld [vmem:[#allocation8 + $0x58] sm:$0xff]
        %v504 = vld [vmem:[#allocation8 + $0x60] sm:$0xff]
        %v505 = vld [vmem:[#allocation8 + $0x68] sm:$0xff]
        %v506 = vld [vmem:[#allocation8 + $0x70] sm:$0xff]
        %v507 = vld [vmem:[#allocation8 + $0x78] sm:$0xff]
        %v508 = vld [vmem:[%s5] sm:$0x1]
        %v510 = vlaneseq
        %v511 = vshrl.u32 %v510, 7
        %v512 = vsub.s32 0, %v511
        %v513 = vrot.slane %v508, %v512
        %515 = vmatprep.subr.mxu0 0.0
        %516 = vmatpush1.msra.mxu0 %v492
        %517 = vmatprep.subr.mxu0 0.0
        %518 = vmatpush1.msra.mxu0 %v493
        %519 = vmatprep.subr.mxu0 0.0
        %520 = vmatpush1.msra.mxu0 %v494
        %521 = vmatprep.subr.mxu0 0.0
        %522 = vmatpush1.msra.mxu0 %v495
        %523 = vmatprep.subr.mxu0 0.0
        %524 = vmatpush1.msra.mxu0 %v496
        %525 = vmatprep.subr.mxu0 0.0
        %526 = vmatpush1.msra.mxu0 %v497
        %527 = vmatprep.subr.mxu0 0.0
        %528 = vmatpush1.msra.mxu0 %v498
        %529 = vmatprep.subr.mxu0 0.0
        %530 = vmatpush1.msra.mxu0 %v499
        %531 = vmatprep.subr.mxu0 0.0
        %532 = vmatpush1.msra.mxu0 %v500
        %533 = vmatprep.subr.mxu0 0.0
        %534 = vmatpush1.msra.mxu0 %v501
        %535 = vmatprep.subr.mxu0 0.0
        %536 = vmatpush1.msra.mxu0 %v502
        %537 = vmatprep.subr.mxu0 0.0
        %538 = vmatpush1.msra.mxu0 %v503
        %539 = vmatprep.subr.mxu0 0.0
        %540 = vmatpush1.msra.mxu0 %v504
        %541 = vmatprep.subr.mxu0 0.0
        %542 = vmatpush1.msra.mxu0 %v505
        %543 = vmatprep.subr.mxu0 0.0
        %544 = vmatpush1.msra.mxu0 %v506
        %545 = vmatprep.subr.mxu0 0.0
        %546 = vmatpush1.msra.mxu0 %v507
        %547 = vmatprep.subr.mxu0 0.0
        %548 = vmatpush1.msra.mxu0 0.0
        %549 = vmatprep.subr.mxu0 0.0
        %550 = vmatpush1.msra.mxu0 0.0
        %551 = vmatprep.subr.mxu0 0.0
        %552 = vmatpush1.msra.mxu0 0.0
        %553 = vmatprep.subr.mxu0 0.0
        %554 = vmatpush1.msra.mxu0 0.0
        %555 = vmatprep.subr.mxu0 0.0
        %556 = vmatpush1.msra.mxu0 0.0
        %557 = vmatprep.subr.mxu0 0.0
        %558 = vmatpush1.msra.mxu0 0.0
        %559 = vmatprep.subr.mxu0 0.0
        %560 = vmatpush1.msra.mxu0 0.0
        %561 = vmatprep.subr.mxu0 0.0
        %562 = vmatpush1.msra.mxu0 0.0
        %563 = vmatprep.subr.mxu0 0.0
        %564 = vmatpush1.msra.mxu0 0.0
        %565 = vmatprep.subr.mxu0 0.0
        %566 = vmatpush1.msra.mxu0 0.0
        %567 = vmatprep.subr.mxu0 0.0
        %568 = vmatpush1.msra.mxu0 0.0
        %569 = vmatprep.subr.mxu0 0.0
        %570 = vmatpush1.msra.mxu0 0.0
        %571 = vmatprep.subr.mxu0 0.0
        %572 = vmatpush1.msra.mxu0 0.0
        %573 = vmatprep.subr.mxu0 0.0
        %574 = vmatpush1.msra.mxu0 0.0
        %575 = vmatprep.subr.mxu0 0.0
        %576 = vmatpush1.msra.mxu0 0.0
        %577 = vmatprep.subr.mxu0 0.0
        %578 = vmatpush1.msra.mxu0 0.0
        %579 = vmatprep.mubr.f32.mxu0 0.0
        %580 = vmatmul.mubr.f32.gmra.mrb[0].mxu0 %v491
        %v581 = vpop.f32.mrb[0].mxu0
        %v582 = vadd.f32 %v513, %v581
        %v583 = vpop.f32.mrb[0].mxu0
        %584 = vdwg.mxu0
        %585 = vst [vmem:[%s310] sm:$0xff] %v582
        %s586 = sand.u32 %s164, 1
        %s587 = scalar_lea.sflag [#allocation4], %s586
        %s588 = sand.u32 %s164, 1
        %s589 = smul.addr %s588, 8
        %s590 = scalar_lea.vmem [#allocation10], %s589
        // Predicated region
        $region61: #{tpu_custom_call.1} parent=43 // pred_check
          %p591 = pneg %p174
        $region62: #{tpu_custom_call.1} parent=43 // pred_check_branch
          %593 = sbr.rel (%p591) target = $region64
        $region63: #{tpu_custom_call.1} parent=43 // pred_region
          %s595 = ssub.s32 128, 128
          %596 = vsyncadd %s587, %s595
          %s597 = smul.addr %s25, 128
          %s598 = scalar_lea.hbm %s6, %s597
          %s600 = sshll.u32 %s590, 4
          %s601 = int_to_ptr.vmem [resolvable:$true] %s600
          %603 = dma.vmem_to_hbm [thread:$0]  %s601, 128, %s598, %s587
        $region64: #{tpu_custom_call.1} parent=43 // pred_fallthru
          _
      $region44: #{tpu_custom_call.1} parent=5 // pred_fallthru
        _
      %p604 = scmp.le.s32.totalorder 2, %s20
      // Predicated region
      $region65: #{tpu_custom_call.1} parent=5 // pred_check
        %p605 = pneg %p604
      $region66: #{tpu_custom_call.1} parent=5 // pred_check_branch
        %607 = sbr.rel (%p605) target = $region68
      $region67: #{tpu_custom_call.1} parent=5 // pred_region
        %s608 = ssub.s32 %s20, 2
        // Predicated region
        $region69: #{tpu_custom_call.1} parent=67 // pred_check
          %p609 = pneg %p180
        $region70: #{tpu_custom_call.1} parent=67 // pred_check_branch
          %611 = sbr.rel (%p609) target = $region72
        $region71: #{tpu_custom_call.1} parent=67 // pred_region
          %s612 = sand.u32 %s165, 1
          %s613 = scalar_lea.sflag [#allocation4], %s612
          %s614 = sand.u32 %s165, 1
          %s615 = smul.addr %s614, 8
          %s616 = scalar_lea.vmem [#allocation10], %s615
          %617 = dma.done %s613, 128
        $region72: #{tpu_custom_call.1} parent=67 // pred_fallthru
          _
      $region68: #{tpu_custom_call.1} parent=5 // pred_fallthru
        _
    $region6: #{tpu_custom_call.1} parent=1 // loop_footer
      %s24 = sadd.s32 1, %s20
    $region7: #{tpu_custom_call.1} parent=1 // loop_footer_branch
      %19 = sbr.rel target = $region3
    $region8: #{tpu_custom_call.1} parent=1 // loop_exit
      _
    %618 = vsyncpa [#allocation3], 1
    %s619 = scalar_lea.sflag [#allocation3], 1
    %620 = vsyncpa %s619, 1
    %621 = vsyncpa [#allocation6], 1
    %622 = vsyncpa [#allocation9], 1
    %623 = vsyncpa [#allocation4], 1
    %s624 = scalar_lea.sflag [#allocation4], 1
    %625 = vsyncpa %s624, 1

</llo_original>
